<compile_context>
chip_gen: v7x
topology: tpu7x:2x2x1
jax: 0.10.0
libtpu: 0.0.40
codegen_flags: <defaults>
</compile_context>

<pallas_src>
import functools

import jax
import jax.numpy as jnp
from jax.experimental import pallas as pl
from jax.experimental.pallas import tpu as pltpu

HIDDEN_UNITS = [20, 20]
_HP = 32  # hidden lane width inside the kernel (pads HIDDEN_UNITS=20 -> 32)


def _round_up(n, m):
    return ((n + m - 1) // m) * m


def _cdiv(a, b):
    return -(-a // b)


# ---------------------------------------------------------------------------
# Kernel
# ---------------------------------------------------------------------------
def _mlp_kernel(x_ref, slab_ref, head_ref, o_ref, *, hp):
    # slab_ref (width hp) row layout, all sections 8-row aligned:
    #   [0, f_rows)          w1   (real rows [:F], lanes [:H0])
    #   [f_rows, f_rows+8)   b1   (row f_rows, lanes [:H0])
    #   [r_w2, r_w2+hp)      w2   (real [:H0, :H1])
    #   [r_b2, r_b2+8)       b2
    # head_ref (width op = round_up(A, 8)) row layout:
    #   [0, hp)              w3   (real [:H1, :A])
    #   [hp, hp+8)           b3
    F = x_ref.shape[1]
    f_rows = _round_up(F, 8)
    r_b1 = f_rows
    r_w2 = f_rows + 8
    r_b2 = r_w2 + hp

    dt = slab_ref.dtype
    xf = x_ref[...].astype(jnp.float32)                            # (tb, F)

    # ---- fc1 ----
    if F <= 16:
        # Tiny feature dim (RL observations): an MXU matmul with K=F wastes a
        # full MXU pass; F broadcasted FMAs on the VPU are cheaper and robust.
        pre = xf[:, 0:1] * slab_ref[0:1, :].astype(jnp.float32)
        for j in range(1, F):
            pre = pre + xf[:, j:j + 1] * slab_ref[j:j + 1, :].astype(jnp.float32)
    else:
        pre = jnp.dot(xf.astype(dt), slab_ref[0:F, :],
                      preferred_element_type=jnp.float32)
    h = jnp.tanh(pre + slab_ref[r_b1:r_b1 + 1, :].astype(jnp.float32))   # (tb, hp)

    # ---- fc2 ----
    h = jnp.dot(h.astype(dt), slab_ref[r_w2:r_w2 + hp, :],
                preferred_element_type=jnp.float32)
    h = jnp.tanh(h + slab_ref[r_b2:r_b2 + 1, :].astype(jnp.float32))     # (tb, hp)

    # ---- fc3 (logits) ---- lanes >= n_action are exactly 0.
    out = jnp.dot(h.astype(dt), head_ref[0:hp, :],
                  preferred_element_type=jnp.float32)
    out = out + head_ref[hp:hp + 1, :].astype(jnp.float32)               # (tb, op)

    o_ref[...] = out.astype(o_ref.dtype)


# ---------------------------------------------------------------------------
# Host-side packing (done ONCE per parameter set) + wrapper
# ---------------------------------------------------------------------------
def pack_params(params, n_features, *, dtype=jnp.float32):
    """Pack w1,b1,w2,b2 into a (R, 32) slab and w3,b3 into a (40, 8) head.

    Padded rows/lanes are exact zeros, so results match the f32 reference.
    """
    H0, H1 = HIDDEN_UNITS
    assert max(HIDDEN_UNITS) <= _HP
    A = params["w3"].shape[1]
    hp = _HP
    op = _round_up(max(A, 1), 8)
    f_rows = _round_up(n_features, 8)

    R = f_rows + 8 + hp + 8
    slab = jnp.zeros((R, hp), dtype)
    slab = slab.at[:n_features, :H0].set(params["w1"].astype(dtype))
    slab = slab.at[f_rows, :H0].set(params["b1"].reshape(-1).astype(dtype))
    r = f_rows + 8
    slab = slab.at[r:r + H0, :H1].set(params["w2"].astype(dtype))
    slab = slab.at[r + hp, :H1].set(params["b2"].reshape(-1).astype(dtype))

    head = jnp.zeros((hp + 8, op), dtype)
    head = head.at[:H1, :A].set(params["w3"].astype(dtype))
    head = head.at[hp, :A].set(params["b3"].reshape(-1).astype(dtype))
    return slab, head


def network_forward_packed(x, slab, head, *, n_action, block_rows=1024):
    """Forward pass using pre-packed weights. x: (B, n_features) -> (B, n_action)."""
    B, F = x.shape
    if B == 0:
        return jnp.zeros((0, n_action), jnp.float32)

    R, hp = slab.shape
    Rh, op = head.shape

    block_rows = max(8, _round_up(block_rows, 8))
    if B <= block_rows:
        tb = _round_up(B, 8)
        nb = 1
    else:
        # Even block count so v7x's 2 TensorCores stay balanced (no-op on v5e/v6e).
        nb = 2 * _cdiv(B, 2 * block_rows)
        tb = _round_up(_cdiv(B, nb), 8)
        nb = _cdiv(B, tb)
    b_pad = nb * tb

    xf = x.astype(jnp.float32)
    if b_pad != B:
        xf = jnp.pad(xf, ((0, b_pad - B), (0, 0)))   # pad batch dim only

    out = pl.pallas_call(
        functools.partial(_mlp_kernel, hp=hp),
        out_shape=jax.ShapeDtypeStruct((b_pad, op), jnp.float32),
        grid=(nb,),
        in_specs=[
            # Activations: one (tb, F) row block per grid step (F == full last dim).
            pl.BlockSpec((tb, F), lambda i: (i, 0)),
            # Packed weights: constant index_map -> fetched once, VMEM-resident.
            pl.BlockSpec((R, hp), lambda i: (0, 0)),
            pl.BlockSpec((Rh, op), lambda i: (0, 0)),
        ],
        out_specs=pl.BlockSpec((tb, op), lambda i: (i, 0)),
        compiler_params=pltpu.CompilerParams(
            dimension_semantics=("parallel",)),
    )(xf, slab, head)

    return out[:B, :n_action]


class PolicyNetwork:
    """JAX/Pallas equivalent of the PyTorch `Network` module.

    Weights are packed into lane-dense slabs once at construction (not per
    forward call) and the forward itself is jitted.
    """

    def __init__(self, params, n_features, n_action, *, use_bf16=False,
                 block_rows=1024):
        self.n_features = n_features
        self.n_action = n_action
        dtype = jnp.bfloat16 if use_bf16 else jnp.float32
        self.slab, self.head = pack_params(params, n_features, dtype=dtype)
        self._forward = jax.jit(functools.partial(
            network_forward_packed, n_action=n_action, block_rows=block_rows))

    def __call__(self, x):
        return self._forward(x, self.slab, self.head)


# ---------------------------------------------------------------------------
# Init + reference
# ---------------------------------------------------------------------------
def init_params(key, n_features, n_action):
    """PyTorch nn.Linear default init: U(-1/sqrt(fan_in), 1/sqrt(fan_in))."""
    ks = jax.random.split(key, 6)

    def lin(kw, kb, fan_in, fan_out):
        bound = 1.0 / jnp.sqrt(jnp.float32(fan_in))
        w = jax.random.uniform(kw, (fan_in, fan_out), jnp.float32, -bound, bound)
        b = jax.random.uniform(kb, (1, fan_out), jnp.float32, -bound, bound)
        return w, b

    w1, b1 = lin(ks[0], ks[1], n_features, HIDDEN_UNITS[0])
    w2, b2 = lin(ks[2], ks[3], HIDDEN_UNITS[0], HIDDEN_UNITS[1])
    w3, b3 = lin(ks[4], ks[5], HIDDEN_UNITS[1], n_action)
    return {"w1": w1, "b1": b1, "w2": w2, "b2": b2, "w3": w3, "b3": b3}


def _reference(x, p):
    h1 = jnp.tanh(x @ p["w1"] + p["b1"])
    h2 = jnp.tanh(h1 @ p["w2"] + p["b2"])
    return h2 @ p["w3"] + p["b3"]


if __name__ == "__main__":
    # CartPole-like REINFORCE policy net: 4 observations -> 2 action logits.
    n_features, n_action = 4, 2
    key = jax.random.PRNGKey(0)
    k_p, k_x, k_xl = jax.random.split(key, 3)
    params = init_params(k_p, n_features, n_action)

    net = PolicyNetwork(params, n_features, n_action)

    # RL-style tiny batch (single row block).
    B = 2
    x = jax.random.normal(k_x, (B, n_features), dtype=jnp.float32)
    out = jax.block_until_ready(net(x))
    ref = _reference(x, params)
    assert out.shape == (B, n_action)
    assert jnp.allclose(out, ref, atol=1e-5, rtol=1e-5), "mismatch vs reference (B=2)"

    # Larger, non-divisible batch exercises the even-count row grid + batch padding.
    BL = 1030
    xl = jax.random.normal(k_xl, (BL, n_features), dtype=jnp.float32)
    outl = jax.block_until_ready(net(xl))
    refl = _reference(xl, params)
    assert outl.shape == (BL, n_action)
    assert jnp.allclose(outl, refl, atol=1e-5, rtol=1e-5), "mismatch vs reference (B=1030)"

    # Optional bf16 MXU path (v6e/v7x) — looser tolerance, gated behind a flag.
    net_bf16 = PolicyNetwork(params, n_features, n_action, use_bf16=True)
    outb = jax.block_until_ready(net_bf16(xl))
    assert jnp.allclose(outb, refl, atol=5e-2, rtol=5e-2), "bf16 path mismatch"

    print("KERNEL_OK")
</pallas_src>

<mosaic_0001>
module attributes {stable_mosaic.version = 11 : i64} {
  func.func @_mlp_kernel(%arg0: i32, %arg1: memref<8x4xf32, #tpu.memory_space<vmem>>, %arg2: memref<56x32xf32, #tpu.memory_space<vmem>>, %arg3: memref<40x8xf32, #tpu.memory_space<vmem>>, %arg4: memref<8x8xf32, #tpu.memory_space<vmem>>) attributes {dimension_semantics = [#tpu.dimension_semantics<parallel>], iteration_bounds = array<i64: 1>, scalar_prefetch = 0 : i64, scratch_operands = 0 : i64, tpu.core_type = #tpu.core_type<tc>, window_params = [{transform_indices = @transform_0, window_bounds = array<i64: 8, 4>}, {pipeline_mode = #tpu.pipeline_mode<synchronous>, transform_indices = @transform_1, window_bounds = array<i64: 56, 32>}, {pipeline_mode = #tpu.pipeline_mode<synchronous>, transform_indices = @transform_2, window_bounds = array<i64: 40, 8>}, {transform_indices = @transform_3, window_bounds = array<i64: 8, 8>}]} {
    %c0 = arith.constant 0 : index
    %c0_0 = arith.constant 0 : index
    %0 = vector.load %arg1[%c0, %c0_0] : memref<8x4xf32, #tpu.memory_space<vmem>>, vector<8x4xf32>
    %1 = vector.extract_strided_slice %0 {offsets = [0, 0], sizes = [8, 1], strides = [1, 1]} : vector<8x4xf32> to vector<8x1xf32>
    %c0_1 = arith.constant 0 : index
    %c0_2 = arith.constant 0 : index
    %2 = vector.load %arg2[%c0_1, %c0_2] : memref<56x32xf32, #tpu.memory_space<vmem>>, vector<1x32xf32>
    %3 = vector.broadcast %1 : vector<8x1xf32> to vector<8x32xf32>
    %4 = vector.broadcast %2 : vector<1x32xf32> to vector<8x32xf32>
    %5 = arith.mulf %3, %4 : vector<8x32xf32>
    %6 = vector.extract_strided_slice %0 {offsets = [0, 1], sizes = [8, 1], strides = [1, 1]} : vector<8x4xf32> to vector<8x1xf32>
    %c1 = arith.constant 1 : index
    %c0_3 = arith.constant 0 : index
    %7 = vector.load %arg2[%c1, %c0_3] : memref<56x32xf32, #tpu.memory_space<vmem>>, vector<1x32xf32>
    %8 = vector.broadcast %6 : vector<8x1xf32> to vector<8x32xf32>
    %9 = vector.broadcast %7 : vector<1x32xf32> to vector<8x32xf32>
    %10 = arith.mulf %8, %9 : vector<8x32xf32>
    %11 = arith.addf %5, %10 : vector<8x32xf32>
    %12 = vector.extract_strided_slice %0 {offsets = [0, 2], sizes = [8, 1], strides = [1, 1]} : vector<8x4xf32> to vector<8x1xf32>
    %c2 = arith.constant 2 : index
    %c0_4 = arith.constant 0 : index
    %13 = vector.load %arg2[%c2, %c0_4] : memref<56x32xf32, #tpu.memory_space<vmem>>, vector<1x32xf32>
    %14 = vector.broadcast %12 : vector<8x1xf32> to vector<8x32xf32>
    %15 = vector.broadcast %13 : vector<1x32xf32> to vector<8x32xf32>
    %16 = arith.mulf %14, %15 : vector<8x32xf32>
    %17 = arith.addf %11, %16 : vector<8x32xf32>
    %18 = vector.extract_strided_slice %0 {offsets = [0, 3], sizes = [8, 1], strides = [1, 1]} : vector<8x4xf32> to vector<8x1xf32>
    %c3 = arith.constant 3 : index
    %c0_5 = arith.constant 0 : index
    %19 = vector.load %arg2[%c3, %c0_5] : memref<56x32xf32, #tpu.memory_space<vmem>>, vector<1x32xf32>
    %20 = vector.broadcast %18 : vector<8x1xf32> to vector<8x32xf32>
    %21 = vector.broadcast %19 : vector<1x32xf32> to vector<8x32xf32>
    %22 = arith.mulf %20, %21 : vector<8x32xf32>
    %23 = arith.addf %17, %22 : vector<8x32xf32>
    %c8 = arith.constant 8 : index
    %c0_6 = arith.constant 0 : index
    %24 = vector.load %arg2[%c8, %c0_6] : memref<56x32xf32, #tpu.memory_space<vmem>>, vector<1x32xf32>
    %25 = vector.broadcast %24 : vector<1x32xf32> to vector<8x32xf32>
    %26 = arith.addf %23, %25 : vector<8x32xf32>
    %27 = math.tanh %26 : vector<8x32xf32>
    %c16 = arith.constant 16 : index
    %c0_7 = arith.constant 0 : index
    %28 = vector.load %arg2[%c16, %c0_7] : memref<56x32xf32, #tpu.memory_space<vmem>>, vector<32x32xf32>
    %cst = arith.constant dense<0.000000e+00> : vector<8x32xf32>
    %29 = tpu.matmul %27, %28, %cst {dimension_numbers = #tpu.dot_dimension_numbers<[1], [0], [0], [1], [0, 0, 1, 1], [], []>} : vector<8x32xf32>, vector<32x32xf32>, vector<8x32xf32> -> vector<8x32xf32>
    %c48 = arith.constant 48 : index
    %c0_8 = arith.constant 0 : index
    %30 = vector.load %arg2[%c48, %c0_8] : memref<56x32xf32, #tpu.memory_space<vmem>>, vector<1x32xf32>
    %31 = vector.broadcast %30 : vector<1x32xf32> to vector<8x32xf32>
    %32 = arith.addf %29, %31 : vector<8x32xf32>
    %33 = math.tanh %32 : vector<8x32xf32>
    %c0_9 = arith.constant 0 : index
    %c0_10 = arith.constant 0 : index
    %34 = vector.load %arg3[%c0_9, %c0_10] : memref<40x8xf32, #tpu.memory_space<vmem>>, vector<32x8xf32>
    %cst_11 = arith.constant dense<0.000000e+00> : vector<8x8xf32>
    %35 = tpu.matmul %33, %34, %cst_11 {dimension_numbers = #tpu.dot_dimension_numbers<[1], [0], [0], [1], [0, 0, 1, 1], [], []>} : vector<8x32xf32>, vector<32x8xf32>, vector<8x8xf32> -> vector<8x8xf32>
    %c32 = arith.constant 32 : index
    %c0_12 = arith.constant 0 : index
    %36 = vector.load %arg3[%c32, %c0_12] : memref<40x8xf32, #tpu.memory_space<vmem>>, vector<1x8xf32>
    %37 = vector.broadcast %36 : vector<1x8xf32> to vector<8x8xf32>
    %38 = arith.addf %35, %37 : vector<8x8xf32>
    %c0_13 = arith.constant 0 : index
    %c0_14 = arith.constant 0 : index
    %39 = vector.load %arg4[%c0_13, %c0_14] : memref<8x8xf32, #tpu.memory_space<vmem>>, vector<8x8xf32>
    tpu.vector_store %arg4[%c0_13, %c0_14], %38 {strides = array<i32>} : memref<8x8xf32, #tpu.memory_space<vmem>>, vector<8x8xf32>,
    return
  }
  func.func @transform_0(%arg0: i32) -> (i32, i32) {
    %c0_i32 = arith.constant 0 : i32
    %c0_i32_0 = arith.constant 0 : i32
    return %arg0, %c0_i32 : i32, i32
  }
  func.func @transform_1(%arg0: i32) -> (i32, i32) {
    %c0_i32 = arith.constant 0 : i32
    %c0_i32_0 = arith.constant 0 : i32
    %c0_i32_1 = arith.constant 0 : i32
    return %c0_i32, %c0_i32_0 : i32, i32
  }
  func.func @transform_2(%arg0: i32) -> (i32, i32) {
    %c0_i32 = arith.constant 0 : i32
    %c0_i32_0 = arith.constant 0 : i32
    %c0_i32_1 = arith.constant 0 : i32
    return %c0_i32, %c0_i32_0 : i32, i32
  }
  func.func @transform_3(%arg0: i32) -> (i32, i32) {
    %c0_i32 = arith.constant 0 : i32
    %c0_i32_0 = arith.constant 0 : i32
    return %arg0, %c0_i32 : i32, i32
  }
}

</mosaic_0001>

<llo_original>
// kernel: network_forward_packed.1
$region0: #{network_forward_packed.1}
  #allocation0 [shape = 'u32[]', space=smem, size = 0x4, offset = 0x4, fixed_abs, tag = 'smem constant byte address 0x4 - core index']
  #allocation1 [shape = 'u32[144,128]{1,0:T(1,128)}', space=vmem, size = 0x12000, scoped, tag = 'internal scratch']
  %s0 = inlined_call_operand.vmem [shape: f32[8,4], index: 0, kind: input, shape index: {}]
  %s1 = inlined_call_operand.vmem [shape: f32[56,32], index: 1, kind: input, shape index: {}]
  %s2 = inlined_call_operand.vmem [shape: f32[40,8], index: 2, kind: input, shape index: {}]
  %s3 = inlined_call_operand.vmem [shape: f32[8,8], index: 3, kind: output, shape index: {}]
  %s4 = sld [smem:[#allocation0]]
  $region22: #{network_forward_packed.1} parent=0
    _
  %s6 = ssub.s32 1, %s4
  %s7 = scalar_select 0, %s6, %s4
  // Predicated region
  $region2: #{network_forward_packed.1} parent=0 // pred_check
    _
  $region3: #{network_forward_packed.1} parent=0 // pred_check_branch
    %9 = sbr.rel (0) target = $region5
  $region4: #{network_forward_packed.1} parent=0 // pred_region
    _
  $region5: #{network_forward_packed.1} parent=0 // pred_fallthru
    _
  // Predicated region
  $region6: #{network_forward_packed.1} parent=0 // pred_check
    _
  $region7: #{network_forward_packed.1} parent=0 // pred_check_branch
    %11 = sbr.rel (0) target = $region9
  $region8: #{network_forward_packed.1} parent=0 // pred_region
    _
  $region9: #{network_forward_packed.1} parent=0 // pred_fallthru
    _
  // Predicated region
  $region10: #{network_forward_packed.1} parent=0 // pred_check
    _
  $region11: #{network_forward_packed.1} parent=0 // pred_check_branch
    %13 = sbr.rel (0) target = $region13
  $region12: #{network_forward_packed.1} parent=0 // pred_region
    _
  $region13: #{network_forward_packed.1} parent=0 // pred_fallthru
    _
  %v14 = vld [vmem:[%s0] sm:$0xff]
  %v15 = vld [vmem:[%s1] sm:$0x1]
  %17 = vset.pattern.permute.xlu0 0
  %18 = vperm.xlu0 %17, %v14
  %v19 = vpop.permute.xlu0 %18
  %v21 = vlaneseq
  %v22 = vshrl.u32 %v21, 7
  %v23 = vsub.s32 0, %v22
  %v24 = vrot.slane %v15, %v23
  %v25 = vmul.f32 %v19, %v24
  %v26 = vld [vmem:[%s1 + $0x1] sm:$0x1]
  %27 = vset.pattern.permute.xlu0 1
  %28 = vperm.xlu0 %27, %v14
  %v29 = vpop.permute.xlu0 %28
  %v31 = vlaneseq
  %v32 = vshrl.u32 %v31, 7
  %v33 = vsub.s32 0, %v32
  %v34 = vrot.slane %v26, %v33
  %v35 = vmul.f32 %v29, %v34
  %v36 = vadd.f32 %v25, %v35
  %v37 = vld [vmem:[%s1 + $0x2] sm:$0x1]
  %38 = vset.pattern.permute.xlu0 2
  %39 = vperm.xlu0 %38, %v14
  %v40 = vpop.permute.xlu0 %39
  %v42 = vlaneseq
  %v43 = vshrl.u32 %v42, 7
  %v44 = vsub.s32 0, %v43
  %v45 = vrot.slane %v37, %v44
  %v46 = vmul.f32 %v40, %v45
  %v47 = vadd.f32 %v36, %v46
  %v48 = vld [vmem:[%s1 + $0x3] sm:$0x1]
  %49 = vset.pattern.permute.xlu0 3
  %50 = vperm.xlu0 %49, %v14
  %v51 = vpop.permute.xlu0 %50
  %v53 = vlaneseq
  %v54 = vshrl.u32 %v53, 7
  %v55 = vsub.s32 0, %v54
  %v56 = vrot.slane %v48, %v55
  %v57 = vmul.f32 %v51, %v56
  %v58 = vadd.f32 %v47, %v57
  %v59 = vld [vmem:[%s1 + $0x8] sm:$0x1]
  %v60 = vlaneseq
  %v61 = vshrl.u32 %v60, 7
  %v62 = vsub.s32 0, %v61
  %v63 = vrot.slane %v59, %v62
  %v64 = vadd.f32 %v58, %v63
  %v65 = vtanh.pop %v64
  %v66 = vld [vmem:[%s1 + $0x10] sm:$0xff]
  %v67 = vld [vmem:[%s1 + $0x18] sm:$0xff]
  %v68 = vld [vmem:[%s1 + $0x20] sm:$0xff]
  %v69 = vld [vmem:[%s1 + $0x28] sm:$0xff]
  %v70 = vld [vmem:[%s1 + $0x30] sm:$0x1]
  %v71 = vlaneseq
  %v72 = vshrl.u32 %v71, 7
  %v73 = vsub.s32 0, %v72
  %v74 = vrot.slane %v70, %v73
  %vm75 = vcmask 261120
  %v77 = vsel %vm75, %v65, 0
  %79 = vmatprep.subr.mxu0 0.0
  %80 = vmatpush1.msra.mxu0 %v66
  %81 = vmatprep.subr.mxu0 0.0
  %82 = vmatpush1.msra.mxu0 %v67
  %83 = vmatprep.subr.mxu0 0.0
  %84 = vmatpush1.msra.mxu0 %v68
  %85 = vmatprep.subr.mxu0 0.0
  %86 = vmatpush1.msra.mxu0 %v69
  %87 = vmatprep.subr.mxu0 0.0
  %88 = vmatpush1.msra.mxu0 0.0
  %89 = vmatprep.subr.mxu0 0.0
  %90 = vmatpush1.msra.mxu0 0.0
  %91 = vmatprep.subr.mxu0 0.0
  %92 = vmatpush1.msra.mxu0 0.0
  %93 = vmatprep.subr.mxu0 0.0
  %94 = vmatpush1.msra.mxu0 0.0
  %95 = vmatprep.subr.mxu0 0.0
  %96 = vmatpush1.msra.mxu0 0.0
  %97 = vmatprep.subr.mxu0 0.0
  %98 = vmatpush1.msra.mxu0 0.0
  %99 = vmatprep.subr.mxu0 0.0
  %100 = vmatpush1.msra.mxu0 0.0
  %101 = vmatprep.subr.mxu0 0.0
  %102 = vmatpush1.msra.mxu0 0.0
  %103 = vmatprep.subr.mxu0 0.0
  %104 = vmatpush1.msra.mxu0 0.0
  %105 = vmatprep.subr.mxu0 0.0
  %106 = vmatpush1.msra.mxu0 0.0
  %107 = vmatprep.subr.mxu0 0.0
  %108 = vmatpush1.msra.mxu0 0.0
  %109 = vmatprep.subr.mxu0 0.0
  %110 = vmatpush1.msra.mxu0 0.0
  %111 = vmatprep.subr.mxu0 0.0
  %112 = vmatpush1.msra.mxu0 0.0
  %113 = vmatprep.subr.mxu0 0.0
  %114 = vmatpush1.msra.mxu0 0.0
  %115 = vmatprep.subr.mxu0 0.0
  %116 = vmatpush1.msra.mxu0 0.0
  %117 = vmatprep.subr.mxu0 0.0
  %118 = vmatpush1.msra.mxu0 0.0
  %119 = vmatprep.subr.mxu0 0.0
  %120 = vmatpush1.msra.mxu0 0.0
  %121 = vmatprep.subr.mxu0 0.0
  %122 = vmatpush1.msra.mxu0 0.0
  %123 = vmatprep.subr.mxu0 0.0
  %124 = vmatpush1.msra.mxu0 0.0
  %125 = vmatprep.subr.mxu0 0.0
  %126 = vmatpush1.msra.mxu0 0.0
  %127 = vmatprep.subr.mxu0 0.0
  %128 = vmatpush1.msra.mxu0 0.0
  %129 = vmatprep.subr.mxu0 0.0
  %130 = vmatpush1.msra.mxu0 0.0
  %131 = vmatprep.subr.mxu0 0.0
  %132 = vmatpush1.msra.mxu0 0.0
  %133 = vmatprep.subr.mxu0 0.0
  %134 = vmatpush1.msra.mxu0 0.0
  %135 = vmatprep.subr.mxu0 0.0
  %136 = vmatpush1.msra.mxu0 0.0
  %137 = vmatprep.subr.mxu0 0.0
  %138 = vmatpush1.msra.mxu0 0.0
  %139 = vmatprep.subr.mxu0 0.0
  %140 = vmatpush1.msra.mxu0 0.0
  %141 = vmatprep.subr.mxu0 0.0
  %142 = vmatpush1.msra.mxu0 0.0
  %143 = vmatprep.mubr.f32.mxu0 0.0
  %144 = vmatmul.mubr.f32.gmra.mrb[0].mxu0 %v77
  %v145 = vpop.f32.mrb[0].mxu0
  %v146 = vadd.f32 %v74, %v145
  %v147 = vpop.f32.mrb[0].mxu0
  %148 = vdwg.mxu0
  %v149 = vtanh.pop %v146
  %v150 = vld [vmem:[%s2] sm:$0xff]
  %v151 = vld [vmem:[%s2 + $0x8] sm:$0xff]
  %v152 = vld [vmem:[%s2 + $0x10] sm:$0xff]
  %v153 = vld [vmem:[%s2 + $0x18] sm:$0xff]
  %v154 = vld [vmem:[%s2 + $0x20] sm:$0x1]
  %v155 = vlaneseq
  %v156 = vshrl.u32 %v155, 7
  %v157 = vsub.s32 0, %v156
  %v158 = vrot.slane %v154, %v157
  %v160 = vsel %vm75, %v149, 0
  %162 = vmatprep.subr.mxu0 0.0
  %163 = vmatpush1.msra.mxu0 %v150
  %164 = vmatprep.subr.mxu0 0.0
  %165 = vmatpush1.msra.mxu0 %v151
  %166 = vmatprep.subr.mxu0 0.0
  %167 = vmatpush1.msra.mxu0 %v152
  %168 = vmatprep.subr.mxu0 0.0
  %169 = vmatpush1.msra.mxu0 %v153
  %170 = vmatprep.subr.mxu0 0.0
  %171 = vmatpush1.msra.mxu0 0.0
  %172 = vmatprep.subr.mxu0 0.0
  %173 = vmatpush1.msra.mxu0 0.0
  %174 = vmatprep.subr.mxu0 0.0
  %175 = vmatpush1.msra.mxu0 0.0
  %176 = vmatprep.subr.mxu0 0.0
  %177 = vmatpush1.msra.mxu0 0.0
  %178 = vmatprep.subr.mxu0 0.0
  %179 = vmatpush1.msra.mxu0 0.0
  %180 = vmatprep.subr.mxu0 0.0
  %181 = vmatpush1.msra.mxu0 0.0
  %182 = vmatprep.subr.mxu0 0.0
  %183 = vmatpush1.msra.mxu0 0.0
  %184 = vmatprep.subr.mxu0 0.0
  %185 = vmatpush1.msra.mxu0 0.0
  %186 = vmatprep.subr.mxu0 0.0
  %187 = vmatpush1.msra.mxu0 0.0
  %188 = vmatprep.subr.mxu0 0.0
  %189 = vmatpush1.msra.mxu0 0.0
  %190 = vmatprep.subr.mxu0 0.0
  %191 = vmatpush1.msra.mxu0 0.0
  %192 = vmatprep.subr.mxu0 0.0
  %193 = vmatpush1.msra.mxu0 0.0
  %194 = vmatprep.subr.mxu0 0.0
  %195 = vmatpush1.msra.mxu0 0.0
  %196 = vmatprep.subr.mxu0 0.0
  %197 = vmatpush1.msra.mxu0 0.0
  %198 = vmatprep.subr.mxu0 0.0
  %199 = vmatpush1.msra.mxu0 0.0
  %200 = vmatprep.subr.mxu0 0.0
  %201 = vmatpush1.msra.mxu0 0.0
  %202 = vmatprep.subr.mxu0 0.0
  %203 = vmatpush1.msra.mxu0 0.0
  %204 = vmatprep.subr.mxu0 0.0
  %205 = vmatpush1.msra.mxu0 0.0
  %206 = vmatprep.subr.mxu0 0.0
  %207 = vmatpush1.msra.mxu0 0.0
  %208 = vmatprep.subr.mxu0 0.0
  %209 = vmatpush1.msra.mxu0 0.0
  %210 = vmatprep.subr.mxu0 0.0
  %211 = vmatpush1.msra.mxu0 0.0
  %212 = vmatprep.subr.mxu0 0.0
  %213 = vmatpush1.msra.mxu0 0.0
  %214 = vmatprep.subr.mxu0 0.0
  %215 = vmatpush1.msra.mxu0 0.0
  %216 = vmatprep.subr.mxu0 0.0
  %217 = vmatpush1.msra.mxu0 0.0
  %218 = vmatprep.subr.mxu0 0.0
  %219 = vmatpush1.msra.mxu0 0.0
  %220 = vmatprep.subr.mxu0 0.0
  %221 = vmatpush1.msra.mxu0 0.0
  %222 = vmatprep.subr.mxu0 0.0
  %223 = vmatpush1.msra.mxu0 0.0
  %224 = vmatprep.subr.mxu0 0.0
  %225 = vmatpush1.msra.mxu0 0.0
  %226 = vmatprep.mubr.f32.mxu0 0.0
  %227 = vmatmul.mubr.f32.gmra.mrb[0].mxu0 %v160
  %v228 = vpop.f32.mrb[0].mxu0
  %v229 = vadd.f32 %v158, %v228
  %v230 = vpop.f32.mrb[0].mxu0
  %231 = vdwg.mxu0
  %vm232 = vcmask 64512
  %233 = vst.msk [vmem:[%s3] sm:$0xff] %vm232, %v229
  // Predicated region
  $region14: #{network_forward_packed.1} parent=0 // pred_check
    _
  $region15: #{network_forward_packed.1} parent=0 // pred_check_branch
    %235 = sbr.rel (0) target = $region17
  $region16: #{network_forward_packed.1} parent=0 // pred_region
    _
  $region17: #{network_forward_packed.1} parent=0 // pred_fallthru
    _
  // Predicated region
  $region18: #{network_forward_packed.1} parent=0 // pred_check
    _
  $region19: #{network_forward_packed.1} parent=0 // pred_check_branch
    %237 = sbr.rel (0) target = $region21
  $region20: #{network_forward_packed.1} parent=0 // pred_region
    _
  $region21: #{network_forward_packed.1} parent=0 // pred_fallthru
    _

</llo_original>
